<compile_context>
chip_gen: v7x
topology: tpu7x:2x2x1
jax: 0.10.0
libtpu: 0.0.40
codegen_flags: <defaults>
</compile_context>

<pallas_src>
import functools

import jax
import jax.numpy as jnp
from jax.experimental import pallas as pl
from jax.experimental.pallas import tpu as pltpu


_BIG = 1e30  # pad value for fake batch rows -> exp(-huge) underflows to 0


def _round_up(x, m):
    return (x + m - 1) // m * m


def _mbd_kernel(m_j_ref, m_i_ref, s_ref, ob_ref, *, ti_inner, bc_pad,
                dot_dtype):
    """One (j-tile, i-tile) grid step of minibatch discrimination.

    m_j_ref : (TJ, BC_pad)              rows whose o_b this tile produces
    m_i_ref : (TJ, BC_pad)              rows contributing sum_i exp(-L1(i, j))
    s_ref   : (TI_INNER*BC_pad, G_pack) stacked block-diagonal summing matrix
    ob_ref  : (TJ, G_pack) f32          lane-packed accumulator / output:
                ob[j, t*B + b] = sum over i-rows with sub-block offset t of
                                 exp(-norm(i, j, b))
    """
    i_step = pl.program_id(1)

    @pl.when(i_step == 0)
    def _():
        ob_ref[...] = jnp.zeros_like(ob_ref)

    n_sub = m_i_ref.shape[0] // ti_inner

    @pl.loop(0, n_sub)
    def _(k):
        i0 = pl.multiple_of(k * ti_inner, ti_inner)
        # Loaded once per inner iteration (not per t); if the register
        # allocator is pressured it can rematerialize from VMEM (3 vld slots,
        # never binding here) instead of spilling.
        m_j = m_j_ref[...]                                        # (TJ, BC_pad)
        norm = None
        for t in range(ti_inner):                                 # static unroll
            row = m_i_ref[pl.ds(i0 + t, 1), :]                    # (1, BC_pad)
            diff = jnp.abs(m_j - row)                             # (TJ, BC_pad) VPU
            if dot_dtype is not None:
                diff = diff.astype(dot_dtype)
            # L1 over kernel_dims, routed into lane group t.  Lane groups are
            # disjoint across t, so summing the partial products builds the
            # lane-dense packed norm while the MXU does all the reduction.
            part = jnp.dot(diff, s_ref[pl.ds(t * bc_pad, bc_pad), :],
                           preferred_element_type=jnp.float32)    # (TJ, G_pack)
            norm = part if norm is None else norm + part
        # Lane-dense exp + accumulate: with B=16, TI_INNER=8 there is zero
        # wasted EUP/VALU work (vs 7/8 waste in the unpacked layout).
        ob_ref[...] += jnp.exp(-norm)


def minibatch_discrimination(x, T, mean=False, *, tile=256, ti_inner=8,
                             min_row_tiles=2, dot_dtype=None):
    """x: (N, in_features); T: (in_features, out_features, kernel_dims)."""
    n, a = x.shape
    a2, b, c = T.shape
    assert a == a2
    bc = b * c

    # Tiny-K matmul: left to XLA; the Pallas kernel handles the N^2 part.
    m = jnp.dot(x, T.reshape(a, bc))                              # (N, B*C)

    bc_pad = _round_up(bc, 128)

    # Row tiling that hugs N; >= 2 tiles along the "parallel" j axis (when N
    # is big enough) so both v7x TensorCores get work.
    n_tiles = max(pl.cdiv(n, tile), 1)
    if n >= 16:
        n_tiles = max(n_tiles, min_row_tiles)
    tj = _round_up(pl.cdiv(n, n_tiles), 8)
    n_pad = tj * n_tiles                       # waste < 8 rows per tile

    # Clamp ti_inner to a divisor of the tile height (tj is a multiple of 8).
    ti_inner = max(1, min(ti_inner, tj))
    while tj % ti_inner:
        ti_inner -= 1

    g = ti_inner * b                           # real packed lanes
    g_pack = _round_up(g, 128)

    # Pad: extra BC columns with 0 (no L1 contribution, also zeroed by S);
    # extra batch rows with _BIG so exp(-norm) underflows to exactly 0.
    # (C * _BIG must stay finite in f32: C < ~3e8, always true in practice.)
    m_pad = jnp.pad(m, ((0, n_pad - n), (0, bc_pad - bc)))
    if n_pad > n:
        m_pad = m_pad.at[n:, :].set(jnp.asarray(_BIG, m_pad.dtype))

    # Stacked block-diagonal summing matrix:
    #   S[t*BC_pad + k, t*B + j] = 1  iff  k // C == j, k < B*C, j < B.
    s_dtype = dot_dtype if dot_dtype is not None else m_pad.dtype
    kk = jnp.arange(ti_inner * bc_pad)
    qq = jnp.arange(g_pack)
    t_row = (kk // bc_pad)[:, None]
    k_in = (kk % bc_pad)[:, None]
    s = ((qq[None, :] < g)
         & (t_row == (qq // b)[None, :])
         & ((k_in // c) == (qq % b)[None, :])
         & (k_in < bc)).astype(s_dtype)

    kernel = functools.partial(_mbd_kernel, ti_inner=ti_inner, bc_pad=bc_pad,
                               dot_dtype=dot_dtype)

    grid = (n_tiles, n_tiles)                  # i (reduction) axis last
    ob_pack = pl.pallas_call(
        kernel,
        out_shape=jax.ShapeDtypeStruct((n_pad, g_pack), jnp.float32),
        grid_spec=pltpu.PrefetchScalarGridSpec(
            num_scalar_prefetch=0,
            grid=grid,
            in_specs=[
                pl.BlockSpec((tj, bc_pad), lambda j, i: (j, 0)),
                pl.BlockSpec((tj, bc_pad), lambda j, i: (i, 0)),
                pl.BlockSpec((ti_inner * bc_pad, g_pack), lambda j, i: (0, 0)),
            ],
            # Output block is constant along i -> VMEM-resident accumulator;
            # lane-dense (G_pack is a multiple of 128) -> unmasked stores.
            out_specs=pl.BlockSpec((tj, g_pack), lambda j, i: (j, 0)),
        ),
        compiler_params=pltpu.CompilerParams(
            dimension_semantics=("parallel", "arbitrary"),
            vmem_limit_bytes=32 * 1024 * 1024,
        ),
    )(m_pad, m_pad, s)

    # Glue (pure plumbing, no hot compute): fold the TI_INNER lane groups,
    # remove the self term exp(0), optional mean, concat with x.
    ob = ob_pack[:n, :g].reshape(n, ti_inner, b).sum(axis=1) - 1.0
    if mean:
        ob = ob / (n - 1)   # N == 1 divides by zero, matching the reference
    return jnp.concatenate([x, ob.astype(x.dtype)], axis=1)


def _reference(x, T, mean=False):
    """Pure-JAX mirror of the PyTorch forward, for verification."""
    n, a = x.shape
    _, b, c = T.shape
    m = (x @ T.reshape(a, b * c)).reshape(n, b, c)
    norm = jnp.abs(m[None, :, :, :] - m[:, None, :, :]).sum(-1)   # (N, N, B)
    ob = jnp.exp(-norm).sum(0) - 1.0
    if mean:
        ob = ob / (n - 1)
    return jnp.concatenate([x, ob], axis=1)


if __name__ == "__main__":
    # Small shapes consistent with the module: batch=4, in_features=8,
    # out_features=16, kernel_dims=8.
    N, A, B, C = 4, 8, 16, 8

    key = jax.random.PRNGKey(0)
    kx, kt = jax.random.split(key)
    x = jax.random.normal(kx, (N, A), dtype=jnp.float32)
    # Deterministic parameter init, mirroring init.normal(T, 0, 1).
    T = jax.random.normal(kt, (A, B, C), dtype=jnp.float32)

    out = minibatch_discrimination(x, T, mean=False)
    out = jax.block_until_ready(out)
    ref = _reference(x, T, mean=False)
    assert out.shape == (N, A + B)
    assert jnp.allclose(out, ref, atol=1e-4, rtol=1e-4)

    # Second check: padding + a real multi-tile (3x3) grid + mean=True.
    N2 = 20
    x2 = jax.random.normal(jax.random.PRNGKey(1), (N2, A), dtype=jnp.float32)
    out2 = minibatch_discrimination(x2, T, mean=True, tile=8, ti_inner=8)
    out2 = jax.block_until_ready(out2)
    ref2 = _reference(x2, T, mean=True)
    assert out2.shape == (N2, A + B)
    assert jnp.allclose(out2, ref2, atol=1e-4, rtol=1e-4)

    # Third check: optional bf16 MXU path (lower precision, so only validate
    # shape / finiteness here).
    out3 = minibatch_discrimination(x2, T, mean=True, tile=8,
                                    dot_dtype=jnp.bfloat16)
    out3 = jax.block_until_ready(out3)
    assert out3.shape == (N2, A + B)
    assert bool(jnp.all(jnp.isfinite(out3)))

    print("KERNEL_OK")
</pallas_src>

<mosaic_0001>
module attributes {stable_mosaic.version = 11 : i64} {
  func.func @_mbd_kernel(%arg0: i32, %arg1: i32, %arg2: memref<8x128xf32, #tpu.memory_space<vmem>>, %arg3: memref<8x128xf32, #tpu.memory_space<vmem>>, %arg4: memref<1024x128xf32, #tpu.memory_space<vmem>>, %arg5: memref<8x128xf32, #tpu.memory_space<vmem>>) attributes {dimension_semantics = [#tpu.dimension_semantics<parallel>, #tpu.dimension_semantics<arbitrary>], iteration_bounds = array<i64: 1, 1>, scalar_prefetch = 0 : i64, scratch_operands = 0 : i64, tpu.core_type = #tpu.core_type<tc>, window_params = [{transform_indices = @transform_0, window_bounds = array<i64: 8, 128>}, {transform_indices = @transform_1, window_bounds = array<i64: 8, 128>}, {pipeline_mode = #tpu.pipeline_mode<synchronous>, transform_indices = @transform_2, window_bounds = array<i64: 1024, 128>}, {transform_indices = @transform_3, window_bounds = array<i64: 8, 128>}]} {
    %c0_i32 = arith.constant 0 : i32
    %0 = arith.cmpi eq, %arg1, %c0_i32 : i32
    %1 = arith.extui %0 : i1 to i32
    %c0_i32_0 = arith.constant 0 : i32
    %2 = arith.cmpi ne, %1, %c0_i32_0 : i32
    scf.if %2 {
      %cst_36 = arith.constant 0.000000e+00 : f32
      %85 = vector.broadcast %cst_36 : f32 to vector<8x128xf32>
      %c0_37 = arith.constant 0 : index
      %c0_38 = arith.constant 0 : index
      %86 = vector.load %arg5[%c0_37, %c0_38] : memref<8x128xf32, #tpu.memory_space<vmem>>, vector<8x128xf32>
      tpu.vector_store %arg5[%c0_37, %c0_38], %85 {strides = array<i32>} : memref<8x128xf32, #tpu.memory_space<vmem>>, vector<8x128xf32>,
    } else {
    }
    %c0_i32_1 = arith.constant 0 : i32
    %c1_i32 = arith.constant 1 : i32
    %3 = arith.muli %c0_i32_1, %c1_i32 : i32
    %c0_i32_2 = arith.constant 0 : i32
    %4 = arith.addi %c0_i32_2, %3 : i32
    %c8_i32 = arith.constant 8 : i32
    %5 = arith.muli %4, %c8_i32 : i32
    %6 = tpu.assume_multiple %5, 8 : i32
    %c0 = arith.constant 0 : index
    %c0_3 = arith.constant 0 : index
    %7 = vector.load %arg2[%c0, %c0_3] : memref<8x128xf32, #tpu.memory_space<vmem>>, vector<8x128xf32>
    %c0_i32_4 = arith.constant 0 : i32
    %8 = arith.addi %6, %c0_i32_4 : i32
    %9 = arith.index_cast %8 : i32 to index
    %c0_5 = arith.constant 0 : index
    %10 = vector.load %arg3[%9, %c0_5] : memref<8x128xf32, #tpu.memory_space<vmem>>, vector<1x128xf32>
    %11 = vector.broadcast %10 : vector<1x128xf32> to vector<8x128xf32>
    %12 = arith.subf %7, %11 : vector<8x128xf32>
    %13 = math.absf %12 : vector<8x128xf32>
    %c0_6 = arith.constant 0 : index
    %c0_7 = arith.constant 0 : index
    %14 = vector.load %arg4[%c0_6, %c0_7] : memref<1024x128xf32, #tpu.memory_space<vmem>>, vector<128x128xf32>
    %cst = arith.constant dense<0.000000e+00> : vector<8x128xf32>
    %15 = tpu.matmul %13, %14, %cst {dimension_numbers = #tpu.dot_dimension_numbers<[1], [0], [0], [1], [0, 0, 1, 1], [], []>} : vector<8x128xf32>, vector<128x128xf32>, vector<8x128xf32> -> vector<8x128xf32>
    %c1_i32_8 = arith.constant 1 : i32
    %16 = arith.addi %6, %c1_i32_8 : i32
    %17 = arith.index_cast %16 : i32 to index
    %c0_9 = arith.constant 0 : index
    %18 = vector.load %arg3[%17, %c0_9] : memref<8x128xf32, #tpu.memory_space<vmem>>, vector<1x128xf32>
    %19 = vector.broadcast %18 : vector<1x128xf32> to vector<8x128xf32>
    %20 = arith.subf %7, %19 : vector<8x128xf32>
    %21 = math.absf %20 : vector<8x128xf32>
    %c128 = arith.constant 128 : index
    %c0_10 = arith.constant 0 : index
    %22 = vector.load %arg4[%c128, %c0_10] : memref<1024x128xf32, #tpu.memory_space<vmem>>, vector<128x128xf32>
    %cst_11 = arith.constant dense<0.000000e+00> : vector<8x128xf32>
    %23 = tpu.matmul %21, %22, %cst_11 {dimension_numbers = #tpu.dot_dimension_numbers<[1], [0], [0], [1], [0, 0, 1, 1], [], []>} : vector<8x128xf32>, vector<128x128xf32>, vector<8x128xf32> -> vector<8x128xf32>
    %24 = arith.addf %15, %23 : vector<8x128xf32>
    %c2_i32 = arith.constant 2 : i32
    %25 = arith.addi %6, %c2_i32 : i32
    %26 = arith.index_cast %25 : i32 to index
    %c0_12 = arith.constant 0 : index
    %27 = vector.load %arg3[%26, %c0_12] : memref<8x128xf32, #tpu.memory_space<vmem>>, vector<1x128xf32>
    %28 = vector.broadcast %27 : vector<1x128xf32> to vector<8x128xf32>
    %29 = arith.subf %7, %28 : vector<8x128xf32>
    %30 = math.absf %29 : vector<8x128xf32>
    %c256 = arith.constant 256 : index
    %c0_13 = arith.constant 0 : index
    %31 = vector.load %arg4[%c256, %c0_13] : memref<1024x128xf32, #tpu.memory_space<vmem>>, vector<128x128xf32>
    %cst_14 = arith.constant dense<0.000000e+00> : vector<8x128xf32>
    %32 = tpu.matmul %30, %31, %cst_14 {dimension_numbers = #tpu.dot_dimension_numbers<[1], [0], [0], [1], [0, 0, 1, 1], [], []>} : vector<8x128xf32>, vector<128x128xf32>, vector<8x128xf32> -> vector<8x128xf32>
    %33 = arith.addf %24, %32 : vector<8x128xf32>
    %c3_i32 = arith.constant 3 : i32
    %34 = arith.addi %6, %c3_i32 : i32
    %35 = arith.index_cast %34 : i32 to index
    %c0_15 = arith.constant 0 : index
    %36 = vector.load %arg3[%35, %c0_15] : memref<8x128xf32, #tpu.memory_space<vmem>>, vector<1x128xf32>
    %37 = vector.broadcast %36 : vector<1x128xf32> to vector<8x128xf32>
    %38 = arith.subf %7, %37 : vector<8x128xf32>
    %39 = math.absf %38 : vector<8x128xf32>
    %c384 = arith.constant 384 : index
    %c0_16 = arith.constant 0 : index
    %40 = vector.load %arg4[%c384, %c0_16] : memref<1024x128xf32, #tpu.memory_space<vmem>>, vector<128x128xf32>
    %cst_17 = arith.constant dense<0.000000e+00> : vector<8x128xf32>
    %41 = tpu.matmul %39, %40, %cst_17 {dimension_numbers = #tpu.dot_dimension_numbers<[1], [0], [0], [1], [0, 0, 1, 1], [], []>} : vector<8x128xf32>, vector<128x128xf32>, vector<8x128xf32> -> vector<8x128xf32>
    %42 = arith.addf %33, %41 : vector<8x128xf32>
    %c4_i32 = arith.constant 4 : i32
    %43 = arith.addi %6, %c4_i32 : i32
    %44 = arith.index_cast %43 : i32 to index
    %c0_18 = arith.constant 0 : index
    %45 = vector.load %arg3[%44, %c0_18] : memref<8x128xf32, #tpu.memory_space<vmem>>, vector<1x128xf32>
    %46 = vector.broadcast %45 : vector<1x128xf32> to vector<8x128xf32>
    %47 = arith.subf %7, %46 : vector<8x128xf32>
    %48 = math.absf %47 : vector<8x128xf32>
    %c512 = arith.constant 512 : index
    %c0_19 = arith.constant 0 : index
    %49 = vector.load %arg4[%c512, %c0_19] : memref<1024x128xf32, #tpu.memory_space<vmem>>, vector<128x128xf32>
    %cst_20 = arith.constant dense<0.000000e+00> : vector<8x128xf32>
    %50 = tpu.matmul %48, %49, %cst_20 {dimension_numbers = #tpu.dot_dimension_numbers<[1], [0], [0], [1], [0, 0, 1, 1], [], []>} : vector<8x128xf32>, vector<128x128xf32>, vector<8x128xf32> -> vector<8x128xf32>
    %51 = arith.addf %42, %50 : vector<8x128xf32>
    %c5_i32 = arith.constant 5 : i32
    %52 = arith.addi %6, %c5_i32 : i32
    %53 = arith.index_cast %52 : i32 to index
    %c0_21 = arith.constant 0 : index
    %54 = vector.load %arg3[%53, %c0_21] : memref<8x128xf32, #tpu.memory_space<vmem>>, vector<1x128xf32>
    %55 = vector.broadcast %54 : vector<1x128xf32> to vector<8x128xf32>
    %56 = arith.subf %7, %55 : vector<8x128xf32>
    %57 = math.absf %56 : vector<8x128xf32>
    %c640 = arith.constant 640 : index
    %c0_22 = arith.constant 0 : index
    %58 = vector.load %arg4[%c640, %c0_22] : memref<1024x128xf32, #tpu.memory_space<vmem>>, vector<128x128xf32>
    %cst_23 = arith.constant dense<0.000000e+00> : vector<8x128xf32>
    %59 = tpu.matmul %57, %58, %cst_23 {dimension_numbers = #tpu.dot_dimension_numbers<[1], [0], [0], [1], [0, 0, 1, 1], [], []>} : vector<8x128xf32>, vector<128x128xf32>, vector<8x128xf32> -> vector<8x128xf32>
    %60 = arith.addf %51, %59 : vector<8x128xf32>
    %c6_i32 = arith.constant 6 : i32
    %61 = arith.addi %6, %c6_i32 : i32
    %62 = arith.index_cast %61 : i32 to index
    %c0_24 = arith.constant 0 : index
    %63 = vector.load %arg3[%62, %c0_24] : memref<8x128xf32, #tpu.memory_space<vmem>>, vector<1x128xf32>
    %64 = vector.broadcast %63 : vector<1x128xf32> to vector<8x128xf32>
    %65 = arith.subf %7, %64 : vector<8x128xf32>
    %66 = math.absf %65 : vector<8x128xf32>
    %c768 = arith.constant 768 : index
    %c0_25 = arith.constant 0 : index
    %67 = vector.load %arg4[%c768, %c0_25] : memref<1024x128xf32, #tpu.memory_space<vmem>>, vector<128x128xf32>
    %cst_26 = arith.constant dense<0.000000e+00> : vector<8x128xf32>
    %68 = tpu.matmul %66, %67, %cst_26 {dimension_numbers = #tpu.dot_dimension_numbers<[1], [0], [0], [1], [0, 0, 1, 1], [], []>} : vector<8x128xf32>, vector<128x128xf32>, vector<8x128xf32> -> vector<8x128xf32>
    %69 = arith.addf %60, %68 : vector<8x128xf32>
    %c7_i32 = arith.constant 7 : i32
    %70 = arith.addi %6, %c7_i32 : i32
    %71 = arith.index_cast %70 : i32 to index
    %c0_27 = arith.constant 0 : index
    %72 = vector.load %arg3[%71, %c0_27] : memref<8x128xf32, #tpu.memory_space<vmem>>, vector<1x128xf32>
    %73 = vector.broadcast %72 : vector<1x128xf32> to vector<8x128xf32>
    %74 = arith.subf %7, %73 : vector<8x128xf32>
    %75 = math.absf %74 : vector<8x128xf32>
    %c896 = arith.constant 896 : index
    %c0_28 = arith.constant 0 : index
    %76 = vector.load %arg4[%c896, %c0_28] : memref<1024x128xf32, #tpu.memory_space<vmem>>, vector<128x128xf32>
    %cst_29 = arith.constant dense<0.000000e+00> : vector<8x128xf32>
    %77 = tpu.matmul %75, %76, %cst_29 {dimension_numbers = #tpu.dot_dimension_numbers<[1], [0], [0], [1], [0, 0, 1, 1], [], []>} : vector<8x128xf32>, vector<128x128xf32>, vector<8x128xf32> -> vector<8x128xf32>
    %78 = arith.addf %69, %77 : vector<8x128xf32>
    %c0_30 = arith.constant 0 : index
    %c0_31 = arith.constant 0 : index
    %79 = vector.load %arg5[%c0_30, %c0_31] : memref<8x128xf32, #tpu.memory_space<vmem>>, vector<8x128xf32>
    %cst_32 = arith.constant 0.000000e+00 : f32
    %80 = vector.broadcast %cst_32 : f32 to vector<8x128xf32>
    %81 = arith.subf %80, %78 : vector<8x128xf32>
    %82 = math.exp %81 : vector<8x128xf32>
    %83 = arith.addf %79, %82 : vector<8x128xf32>
    %c0_33 = arith.constant 0 : index
    %c0_34 = arith.constant 0 : index
    %84 = vector.load %arg5[%c0_33, %c0_34] : memref<8x128xf32, #tpu.memory_space<vmem>>, vector<8x128xf32>
    tpu.vector_store %arg5[%c0_33, %c0_34], %83 {strides = array<i32>} : memref<8x128xf32, #tpu.memory_space<vmem>>, vector<8x128xf32>,
    %c1_i32_35 = arith.constant 1 : i32
    return
  }
  func.func @transform_0(%arg0: i32, %arg1: i32) -> (i32, i32) {
    %c0_i32 = arith.constant 0 : i32
    %c0_i32_0 = arith.constant 0 : i32
    return %arg0, %c0_i32 : i32, i32
  }
  func.func @transform_1(%arg0: i32, %arg1: i32) -> (i32, i32) {
    %c0_i32 = arith.constant 0 : i32
    %c0_i32_0 = arith.constant 0 : i32
    return %arg1, %c0_i32 : i32, i32
  }
  func.func @transform_2(%arg0: i32, %arg1: i32) -> (i32, i32) {
    %c0_i32 = arith.constant 0 : i32
    %c0_i32_0 = arith.constant 0 : i32
    %c0_i32_1 = arith.constant 0 : i32
    return %c0_i32, %c0_i32_0 : i32, i32
  }
  func.func @transform_3(%arg0: i32, %arg1: i32) -> (i32, i32) {
    %c0_i32 = arith.constant 0 : i32
    %c0_i32_0 = arith.constant 0 : i32
    return %arg0, %c0_i32 : i32, i32
  }
}

</mosaic_0001>

<llo_original>
// kernel: tpu_custom_call.1
$region0: #{tpu_custom_call.1}
  #allocation0 [shape = 'u32[]', space=smem, size = 0x4, offset = 0x4, fixed_abs, tag = 'smem constant byte address 0x4 - core index']
  #allocation1 [shape = 'u32[144,128]{1,0:T(1,128)}', space=vmem, size = 0x12000, scoped, tag = 'internal scratch']
  %s0 = inlined_call_operand.hbm [shape: f32[8,128], index: 0, kind: input, shape index: {}]
  %s1 = inlined_call_operand.hbm [shape: f32[8,128], index: 1, kind: input, shape index: {}]
  %s2 = inlined_call_operand.hbm [shape: f32[1024,128], index: 2, kind: input, shape index: {}]
  %s3 = inlined_call_operand.hbm [shape: f32[8,128], index: 3, kind: output, shape index: {}]
  %s4 = sld [smem:[#allocation0]]
  $region38: #{tpu_custom_call.1} parent=0
    _
  %s6 = ssub.s32 1, %s4
  %s7 = scalar_select 0, %s6, %s4
  $region1: #{tpu_custom_call.1} parent=0
    #allocation2 [shape = 'u8[4096]{0}', space=vmem, size = 0x1000, scoped, tag = 'input window, operand 0, single buffered']
    #allocation3 [shape = 's32[1]{0}', space=sflag, size = 0x4, scoped, tag = 'scoped memory for tpu_custom_call.1']
    #allocation4 [shape = 's32[1]{0}', space=sflag, size = 0x4, scoped, tag = 'scoped memory for tpu_custom_call.1']
    #allocation5 [shape = 'u8[4096]{0}', space=vmem, size = 0x1000, scoped, tag = 'input window, operand 1, single buffered']
    #allocation6 [shape = 's32[1]{0}', space=sflag, size = 0x4, scoped, tag = 'scoped memory for tpu_custom_call.1']
    #allocation7 [shape = 'u8[524288]{0}', space=vmem, size = 0x80000, scoped, tag = 'input window, operand 2, single buffered']
    #allocation8 [shape = 'u8[4096]{0}', space=vmem, size = 0x1000, scoped, tag = 'output window, operand 0, single buffered']
    %8 = vsyncpa [#allocation3], 0
    %9 = vsyncpa [#allocation6], 0
    %10 = vsyncpa [#allocation4], 0
    // Predicated region
    $region2: #{tpu_custom_call.1} parent=1 // pred_check
      _
    $region3: #{tpu_custom_call.1} parent=1 // pred_check_branch
      %12 = sbr.rel (0) target = $region5
    $region4: #{tpu_custom_call.1} parent=1 // pred_region
      %s14 = ssub.s32 128, 128
      %15 = vsyncadd [#allocation3], %s14
      %s17 = sshll.u32 [#allocation2], 4
      %s18 = int_to_ptr.vmem [resolvable:$true] %s17
      %20 = dma.hbm_to_vmem [thread:$0]  %s0, 128, %s18, [#allocation3]
    $region5: #{tpu_custom_call.1} parent=1 // pred_fallthru
      _
    // Predicated region
    $region6: #{tpu_custom_call.1} parent=1 // pred_check
      _
    $region7: #{tpu_custom_call.1} parent=1 // pred_check_branch
      %22 = sbr.rel (0) target = $region9
    $region8: #{tpu_custom_call.1} parent=1 // pred_region
      %s24 = ssub.s32 128, 128
      %25 = vsyncadd [#allocation6], %s24
      %s27 = sshll.u32 [#allocation5], 4
      %s28 = int_to_ptr.vmem [resolvable:$true] %s27
      %30 = dma.hbm_to_vmem [thread:$0]  %s1, 128, %s28, [#allocation6]
    $region9: #{tpu_custom_call.1} parent=1 // pred_fallthru
      _
    // Predicated region
    $region10: #{tpu_custom_call.1} parent=1 // pred_check
      _
    $region11: #{tpu_custom_call.1} parent=1 // pred_check_branch
      %32 = sbr.rel (0) target = $region13
    $region12: #{tpu_custom_call.1} parent=1 // pred_region
      %s34 = ssub.s32 16384, 16384
      %35 = vsyncadd [#allocation6], %s34
      %s36 = sshll.u32 [#allocation7], 4
      %s37 = int_to_ptr.vmem [resolvable:$true] %s36
      %42 = dma.hbm_to_vmem [thread:$0]  %s2, 16384, %s37, [#allocation6], 128, 128, 8
    $region13: #{tpu_custom_call.1} parent=1 // pred_fallthru
      _
    // Predicated region
    $region14: #{tpu_custom_call.1} parent=1 // pred_check
      _
    $region15: #{tpu_custom_call.1} parent=1 // pred_check_branch
      %44 = sbr.rel (0) target = $region17
    $region16: #{tpu_custom_call.1} parent=1 // pred_region
      %45 = dma.done [#allocation3], 128
    $region17: #{tpu_custom_call.1} parent=1 // pred_fallthru
      _
    // Predicated region
    $region18: #{tpu_custom_call.1} parent=1 // pred_check
      _
    $region19: #{tpu_custom_call.1} parent=1 // pred_check_branch
      %47 = sbr.rel (0) target = $region21
    $region20: #{tpu_custom_call.1} parent=1 // pred_region
      %48 = dma.done [#allocation6], 128
    $region21: #{tpu_custom_call.1} parent=1 // pred_fallthru
      _
    // Predicated region
    $region22: #{tpu_custom_call.1} parent=1 // pred_check
      _
    $region23: #{tpu_custom_call.1} parent=1 // pred_check_branch
      %50 = sbr.rel (0) target = $region25
    $region24: #{tpu_custom_call.1} parent=1 // pred_region
      %51 = dma.done [#allocation6], 16384
    $region25: #{tpu_custom_call.1} parent=1 // pred_fallthru
      _
    %p52 = scmp.eq.s32.totalorder 0, 0
    // Predicated region
    $region26: #{tpu_custom_call.1} parent=1 // pred_check
      %p53 = pneg %p52
    $region27: #{tpu_custom_call.1} parent=1 // pred_check_branch
      %55 = sbr.rel (%p53) target = $region29
    $region28: #{tpu_custom_call.1} parent=1 // pred_region
      %56 = vst [vmem:[#allocation8] sm:$0xff] 0.0
    $region29: #{tpu_custom_call.1} parent=1 // pred_fallthru
      _
    %v57 = vld [vmem:[#allocation2] sm:$0xff]
    %v58 = vld [vmem:[#allocation5] sm:$0x1]
    %v59 = vlaneseq
    %v60 = vshrl.u32 %v59, 7
    %v61 = vsub.s32 0, %v60
    %v62 = vrot.slane %v58, %v61
    %v63 = vsub.f32 %v57, %v62
    %v64 = vand.u32 2147483647, %v63
    %v65 = vld [vmem:[#allocation7] sm:$0xff]
    %v66 = vld [vmem:[#allocation7 + $0x8] sm:$0xff]
    %v67 = vld [vmem:[#allocation7 + $0x10] sm:$0xff]
    %v68 = vld [vmem:[#allocation7 + $0x18] sm:$0xff]
    %v69 = vld [vmem:[#allocation7 + $0x20] sm:$0xff]
    %v70 = vld [vmem:[#allocation7 + $0x28] sm:$0xff]
    %v71 = vld [vmem:[#allocation7 + $0x30] sm:$0xff]
    %v72 = vld [vmem:[#allocation7 + $0x38] sm:$0xff]
    %v73 = vld [vmem:[#allocation7 + $0x40] sm:$0xff]
    %v74 = vld [vmem:[#allocation7 + $0x48] sm:$0xff]
    %v75 = vld [vmem:[#allocation7 + $0x50] sm:$0xff]
    %v76 = vld [vmem:[#allocation7 + $0x58] sm:$0xff]
    %v77 = vld [vmem:[#allocation7 + $0x60] sm:$0xff]
    %v78 = vld [vmem:[#allocation7 + $0x68] sm:$0xff]
    %v79 = vld [vmem:[#allocation7 + $0x70] sm:$0xff]
    %v80 = vld [vmem:[#allocation7 + $0x78] sm:$0xff]
    %s81 = sadd.s32 0, 1
    %s82 = scalar_lea.vmem [#allocation5], %s81
    %v83 = vld [vmem:[%s82] sm:$0x1]
    %v84 = vlaneseq
    %v85 = vshrl.u32 %v84, 7
    %v86 = vsub.s32 0, %v85
    %v87 = vrot.slane %v83, %v86
    %v88 = vsub.f32 %v57, %v87
    %v89 = vand.u32 2147483647, %v88
    %v90 = vld [vmem:[#allocation7 + $0x80] sm:$0xff]
    %v91 = vld [vmem:[#allocation7 + $0x88] sm:$0xff]
    %v92 = vld [vmem:[#allocation7 + $0x90] sm:$0xff]
    %v93 = vld [vmem:[#allocation7 + $0x98] sm:$0xff]
    %v94 = vld [vmem:[#allocation7 + $0xa0] sm:$0xff]
    %v95 = vld [vmem:[#allocation7 + $0xa8] sm:$0xff]
    %v96 = vld [vmem:[#allocation7 + $0xb0] sm:$0xff]
    %v97 = vld [vmem:[#allocation7 + $0xb8] sm:$0xff]
    %v98 = vld [vmem:[#allocation7 + $0xc0] sm:$0xff]
    %v99 = vld [vmem:[#allocation7 + $0xc8] sm:$0xff]
    %v100 = vld [vmem:[#allocation7 + $0xd0] sm:$0xff]
    %v101 = vld [vmem:[#allocation7 + $0xd8] sm:$0xff]
    %v102 = vld [vmem:[#allocation7 + $0xe0] sm:$0xff]
    %v103 = vld [vmem:[#allocation7 + $0xe8] sm:$0xff]
    %v104 = vld [vmem:[#allocation7 + $0xf0] sm:$0xff]
    %v105 = vld [vmem:[#allocation7 + $0xf8] sm:$0xff]
    %106 = vmatprep.subr.mxu0 0.0
    %107 = vmatpush1.msra.mxu0 %v90
    %108 = vmatprep.subr.mxu0 0.0
    %109 = vmatpush1.msra.mxu0 %v91
    %110 = vmatprep.subr.mxu0 0.0
    %111 = vmatpush1.msra.mxu0 %v92
    %112 = vmatprep.subr.mxu0 0.0
    %113 = vmatpush1.msra.mxu0 %v93
    %114 = vmatprep.subr.mxu0 0.0
    %115 = vmatpush1.msra.mxu0 %v94
    %116 = vmatprep.subr.mxu0 0.0
    %117 = vmatpush1.msra.mxu0 %v95
    %118 = vmatprep.subr.mxu0 0.0
    %119 = vmatpush1.msra.mxu0 %v96
    %120 = vmatprep.subr.mxu0 0.0
    %121 = vmatpush1.msra.mxu0 %v97
    %122 = vmatprep.subr.mxu0 0.0
    %123 = vmatpush1.msra.mxu0 %v98
    %124 = vmatprep.subr.mxu0 0.0
    %125 = vmatpush1.msra.mxu0 %v99
    %126 = vmatprep.subr.mxu0 0.0
    %127 = vmatpush1.msra.mxu0 %v100
    %128 = vmatprep.subr.mxu0 0.0
    %129 = vmatpush1.msra.mxu0 %v101
    %130 = vmatprep.subr.mxu0 0.0
    %131 = vmatpush1.msra.mxu0 %v102
    %132 = vmatprep.subr.mxu0 0.0
    %133 = vmatpush1.msra.mxu0 %v103
    %134 = vmatprep.subr.mxu0 0.0
    %135 = vmatpush1.msra.mxu0 %v104
    %136 = vmatprep.subr.mxu0 0.0
    %137 = vmatpush1.msra.mxu0 %v105
    %138 = vmatprep.subr.mxu0 0.0
    %139 = vmatpush1.msra.mxu0 0.0
    %140 = vmatprep.subr.mxu0 0.0
    %141 = vmatpush1.msra.mxu0 0.0
    %142 = vmatprep.subr.mxu0 0.0
    %143 = vmatpush1.msra.mxu0 0.0
    %144 = vmatprep.subr.mxu0 0.0
    %145 = vmatpush1.msra.mxu0 0.0
    %146 = vmatprep.subr.mxu0 0.0
    %147 = vmatpush1.msra.mxu0 0.0
    %148 = vmatprep.subr.mxu0 0.0
    %149 = vmatpush1.msra.mxu0 0.0
    %150 = vmatprep.subr.mxu0 0.0
    %151 = vmatpush1.msra.mxu0 0.0
    %152 = vmatprep.subr.mxu0 0.0
    %153 = vmatpush1.msra.mxu0 0.0
    %154 = vmatprep.subr.mxu0 0.0
    %155 = vmatpush1.msra.mxu0 0.0
    %156 = vmatprep.subr.mxu0 0.0
    %157 = vmatpush1.msra.mxu0 0.0
    %158 = vmatprep.subr.mxu0 0.0
    %159 = vmatpush1.msra.mxu0 0.0
    %160 = vmatprep.subr.mxu0 0.0
    %161 = vmatpush1.msra.mxu0 0.0
    %162 = vmatprep.subr.mxu0 0.0
    %163 = vmatpush1.msra.mxu0 0.0
    %164 = vmatprep.subr.mxu0 0.0
    %165 = vmatpush1.msra.mxu0 0.0
    %166 = vmatprep.subr.mxu0 0.0
    %167 = vmatpush1.msra.mxu0 0.0
    %168 = vmatprep.subr.mxu0 0.0
    %169 = vmatpush1.msra.mxu0 0.0
    %170 = vmatprep.mubr.f32.mxu0 0.0
    %171 = vmatmul.mubr.f32.gmra.mrb[0].mxu0 %v89
    %v172 = vpop.f32.mrb[0].mxu0
    %v173 = vadd.f32 0.0, %v172
    %v174 = vpop.f32.mrb[0].mxu0
    %175 = vdwg.mxu0
    %176 = vmatprep.subr.mxu0 0.0
    %177 = vmatpush1.msra.mxu0 %v65
    %178 = vmatprep.subr.mxu0 0.0
    %179 = vmatpush1.msra.mxu0 %v66
    %180 = vmatprep.subr.mxu0 0.0
    %181 = vmatpush1.msra.mxu0 %v67
    %182 = vmatprep.subr.mxu0 0.0
    %183 = vmatpush1.msra.mxu0 %v68
    %184 = vmatprep.subr.mxu0 0.0
    %185 = vmatpush1.msra.mxu0 %v69
    %186 = vmatprep.subr.mxu0 0.0
    %187 = vmatpush1.msra.mxu0 %v70
    %188 = vmatprep.subr.mxu0 0.0
    %189 = vmatpush1.msra.mxu0 %v71
    %190 = vmatprep.subr.mxu0 0.0
    %191 = vmatpush1.msra.mxu0 %v72
    %192 = vmatprep.subr.mxu0 0.0
    %193 = vmatpush1.msra.mxu0 %v73
    %194 = vmatprep.subr.mxu0 0.0
    %195 = vmatpush1.msra.mxu0 %v74
    %196 = vmatprep.subr.mxu0 0.0
    %197 = vmatpush1.msra.mxu0 %v75
    %198 = vmatprep.subr.mxu0 0.0
    %199 = vmatpush1.msra.mxu0 %v76
    %200 = vmatprep.subr.mxu0 0.0
    %201 = vmatpush1.msra.mxu0 %v77
    %202 = vmatprep.subr.mxu0 0.0
    %203 = vmatpush1.msra.mxu0 %v78
    %204 = vmatprep.subr.mxu0 0.0
    %205 = vmatpush1.msra.mxu0 %v79
    %206 = vmatprep.subr.mxu0 0.0
    %207 = vmatpush1.msra.mxu0 %v80
    %208 = vmatprep.subr.mxu0 0.0
    %209 = vmatpush1.msra.mxu0 0.0
    %210 = vmatprep.subr.mxu0 0.0
    %211 = vmatpush1.msra.mxu0 0.0
    %212 = vmatprep.subr.mxu0 0.0
    %213 = vmatpush1.msra.mxu0 0.0
    %214 = vmatprep.subr.mxu0 0.0
    %215 = vmatpush1.msra.mxu0 0.0
    %216 = vmatprep.subr.mxu0 0.0
    %217 = vmatpush1.msra.mxu0 0.0
    %218 = vmatprep.subr.mxu0 0.0
    %219 = vmatpush1.msra.mxu0 0.0
    %220 = vmatprep.subr.mxu0 0.0
    %221 = vmatpush1.msra.mxu0 0.0
    %222 = vmatprep.subr.mxu0 0.0
    %223 = vmatpush1.msra.mxu0 0.0
    %224 = vmatprep.subr.mxu0 0.0
    %225 = vmatpush1.msra.mxu0 0.0
    %226 = vmatprep.subr.mxu0 0.0
    %227 = vmatpush1.msra.mxu0 0.0
    %228 = vmatprep.subr.mxu0 0.0
    %229 = vmatpush1.msra.mxu0 0.0
    %230 = vmatprep.subr.mxu0 0.0
    %231 = vmatpush1.msra.mxu0 0.0
    %232 = vmatprep.subr.mxu0 0.0
    %233 = vmatpush1.msra.mxu0 0.0
    %234 = vmatprep.subr.mxu0 0.0
    %235 = vmatpush1.msra.mxu0 0.0
    %236 = vmatprep.subr.mxu0 0.0
    %237 = vmatpush1.msra.mxu0 0.0
    %238 = vmatprep.subr.mxu0 0.0
    %239 = vmatpush1.msra.mxu0 0.0
    %240 = vmatprep.mubr.f32.mxu0 0.0
    %241 = vmatmul.mubr.f32.gmra.mrb[0].mxu0 %v64
    %v242 = vpop.f32.mrb[0].mxu0
    %v243 = vadd.f32 %v173, %v242
    %v244 = vpop.f32.mrb[0].mxu0
    %245 = vdwg.mxu0
    %s246 = sadd.s32 0, 2
    %s247 = scalar_lea.vmem [#allocation5], %s246
    %v248 = vld [vmem:[%s247] sm:$0x1]
    %v249 = vlaneseq
    %v250 = vshrl.u32 %v249, 7
    %v251 = vsub.s32 0, %v250
    %v252 = vrot.slane %v248, %v251
    %v253 = vsub.f32 %v57, %v252
    %v254 = vand.u32 2147483647, %v253
    %v255 = vld [vmem:[#allocation7 + $0x100] sm:$0xff]
    %v256 = vld [vmem:[#allocation7 + $0x108] sm:$0xff]
    %v257 = vld [vmem:[#allocation7 + $0x110] sm:$0xff]
    %v258 = vld [vmem:[#allocation7 + $0x118] sm:$0xff]
    %v259 = vld [vmem:[#allocation7 + $0x120] sm:$0xff]
    %v260 = vld [vmem:[#allocation7 + $0x128] sm:$0xff]
    %v261 = vld [vmem:[#allocation7 + $0x130] sm:$0xff]
    %v262 = vld [vmem:[#allocation7 + $0x138] sm:$0xff]
    %v263 = vld [vmem:[#allocation7 + $0x140] sm:$0xff]
    %v264 = vld [vmem:[#allocation7 + $0x148] sm:$0xff]
    %v265 = vld [vmem:[#allocation7 + $0x150] sm:$0xff]
    %v266 = vld [vmem:[#allocation7 + $0x158] sm:$0xff]
    %v267 = vld [vmem:[#allocation7 + $0x160] sm:$0xff]
    %v268 = vld [vmem:[#allocation7 + $0x168] sm:$0xff]
    %v269 = vld [vmem:[#allocation7 + $0x170] sm:$0xff]
    %v270 = vld [vmem:[#allocation7 + $0x178] sm:$0xff]
    %271 = vmatprep.subr.mxu0 0.0
    %272 = vmatpush1.msra.mxu0 %v255
    %273 = vmatprep.subr.mxu0 0.0
    %274 = vmatpush1.msra.mxu0 %v256
    %275 = vmatprep.subr.mxu0 0.0
    %276 = vmatpush1.msra.mxu0 %v257
    %277 = vmatprep.subr.mxu0 0.0
    %278 = vmatpush1.msra.mxu0 %v258
    %279 = vmatprep.subr.mxu0 0.0
    %280 = vmatpush1.msra.mxu0 %v259
    %281 = vmatprep.subr.mxu0 0.0
    %282 = vmatpush1.msra.mxu0 %v260
    %283 = vmatprep.subr.mxu0 0.0
    %284 = vmatpush1.msra.mxu0 %v261
    %285 = vmatprep.subr.mxu0 0.0
    %286 = vmatpush1.msra.mxu0 %v262
    %287 = vmatprep.subr.mxu0 0.0
    %288 = vmatpush1.msra.mxu0 %v263
    %289 = vmatprep.subr.mxu0 0.0
    %290 = vmatpush1.msra.mxu0 %v264
    %291 = vmatprep.subr.mxu0 0.0
    %292 = vmatpush1.msra.mxu0 %v265
    %293 = vmatprep.subr.mxu0 0.0
    %294 = vmatpush1.msra.mxu0 %v266
    %295 = vmatprep.subr.mxu0 0.0
    %296 = vmatpush1.msra.mxu0 %v267
    %297 = vmatprep.subr.mxu0 0.0
    %298 = vmatpush1.msra.mxu0 %v268
    %299 = vmatprep.subr.mxu0 0.0
    %300 = vmatpush1.msra.mxu0 %v269
    %301 = vmatprep.subr.mxu0 0.0
    %302 = vmatpush1.msra.mxu0 %v270
    %303 = vmatprep.subr.mxu0 0.0
    %304 = vmatpush1.msra.mxu0 0.0
    %305 = vmatprep.subr.mxu0 0.0
    %306 = vmatpush1.msra.mxu0 0.0
    %307 = vmatprep.subr.mxu0 0.0
    %308 = vmatpush1.msra.mxu0 0.0
    %309 = vmatprep.subr.mxu0 0.0
    %310 = vmatpush1.msra.mxu0 0.0
    %311 = vmatprep.subr.mxu0 0.0
    %312 = vmatpush1.msra.mxu0 0.0
    %313 = vmatprep.subr.mxu0 0.0
    %314 = vmatpush1.msra.mxu0 0.0
    %315 = vmatprep.subr.mxu0 0.0
    %316 = vmatpush1.msra.mxu0 0.0
    %317 = vmatprep.subr.mxu0 0.0
    %318 = vmatpush1.msra.mxu0 0.0
    %319 = vmatprep.subr.mxu0 0.0
    %320 = vmatpush1.msra.mxu0 0.0
    %321 = vmatprep.subr.mxu0 0.0
    %322 = vmatpush1.msra.mxu0 0.0
    %323 = vmatprep.subr.mxu0 0.0
    %324 = vmatpush1.msra.mxu0 0.0
    %325 = vmatprep.subr.mxu0 0.0
    %326 = vmatpush1.msra.mxu0 0.0
    %327 = vmatprep.subr.mxu0 0.0
    %328 = vmatpush1.msra.mxu0 0.0
    %329 = vmatprep.subr.mxu0 0.0
    %330 = vmatpush1.msra.mxu0 0.0
    %331 = vmatprep.subr.mxu0 0.0
    %332 = vmatpush1.msra.mxu0 0.0
    %333 = vmatprep.subr.mxu0 0.0
    %334 = vmatpush1.msra.mxu0 0.0
    %335 = vmatprep.mubr.f32.mxu0 0.0
    %336 = vmatmul.mubr.f32.gmra.mrb[0].mxu0 %v254
    %v337 = vpop.f32.mrb[0].mxu0
    %v338 = vadd.f32 0.0, %v337
    %v339 = vpop.f32.mrb[0].mxu0
    %340 = vdwg.mxu0
    %v341 = vadd.f32 %v243, %v338
    %s342 = sadd.s32 0, 3
    %s343 = scalar_lea.vmem [#allocation5], %s342
    %v344 = vld [vmem:[%s343] sm:$0x1]
    %v345 = vlaneseq
    %v346 = vshrl.u32 %v345, 7
    %v347 = vsub.s32 0, %v346
    %v348 = vrot.slane %v344, %v347
    %v349 = vsub.f32 %v57, %v348
    %v350 = vand.u32 2147483647, %v349
    %v351 = vld [vmem:[#allocation7 + $0x180] sm:$0xff]
    %v352 = vld [vmem:[#allocation7 + $0x188] sm:$0xff]
    %v353 = vld [vmem:[#allocation7 + $0x190] sm:$0xff]
    %v354 = vld [vmem:[#allocation7 + $0x198] sm:$0xff]
    %v355 = vld [vmem:[#allocation7 + $0x1a0] sm:$0xff]
    %v356 = vld [vmem:[#allocation7 + $0x1a8] sm:$0xff]
    %v357 = vld [vmem:[#allocation7 + $0x1b0] sm:$0xff]
    %v358 = vld [vmem:[#allocation7 + $0x1b8] sm:$0xff]
    %v359 = vld [vmem:[#allocation7 + $0x1c0] sm:$0xff]
    %v360 = vld [vmem:[#allocation7 + $0x1c8] sm:$0xff]
    %v361 = vld [vmem:[#allocation7 + $0x1d0] sm:$0xff]
    %v362 = vld [vmem:[#allocation7 + $0x1d8] sm:$0xff]
    %v363 = vld [vmem:[#allocation7 + $0x1e0] sm:$0xff]
    %v364 = vld [vmem:[#allocation7 + $0x1e8] sm:$0xff]
    %v365 = vld [vmem:[#allocation7 + $0x1f0] sm:$0xff]
    %v366 = vld [vmem:[#allocation7 + $0x1f8] sm:$0xff]
    %367 = vmatprep.subr.mxu0 0.0
    %368 = vmatpush1.msra.mxu0 %v351
    %369 = vmatprep.subr.mxu0 0.0
    %370 = vmatpush1.msra.mxu0 %v352
    %371 = vmatprep.subr.mxu0 0.0
    %372 = vmatpush1.msra.mxu0 %v353
    %373 = vmatprep.subr.mxu0 0.0
    %374 = vmatpush1.msra.mxu0 %v354
    %375 = vmatprep.subr.mxu0 0.0
    %376 = vmatpush1.msra.mxu0 %v355
    %377 = vmatprep.subr.mxu0 0.0
    %378 = vmatpush1.msra.mxu0 %v356
    %379 = vmatprep.subr.mxu0 0.0
    %380 = vmatpush1.msra.mxu0 %v357
    %381 = vmatprep.subr.mxu0 0.0
    %382 = vmatpush1.msra.mxu0 %v358
    %383 = vmatprep.subr.mxu0 0.0
    %384 = vmatpush1.msra.mxu0 %v359
    %385 = vmatprep.subr.mxu0 0.0
    %386 = vmatpush1.msra.mxu0 %v360
    %387 = vmatprep.subr.mxu0 0.0
    %388 = vmatpush1.msra.mxu0 %v361
    %389 = vmatprep.subr.mxu0 0.0
    %390 = vmatpush1.msra.mxu0 %v362
    %391 = vmatprep.subr.mxu0 0.0
    %392 = vmatpush1.msra.mxu0 %v363
    %393 = vmatprep.subr.mxu0 0.0
    %394 = vmatpush1.msra.mxu0 %v364
    %395 = vmatprep.subr.mxu0 0.0
    %396 = vmatpush1.msra.mxu0 %v365
    %397 = vmatprep.subr.mxu0 0.0
    %398 = vmatpush1.msra.mxu0 %v366
    %399 = vmatprep.subr.mxu0 0.0
    %400 = vmatpush1.msra.mxu0 0.0
    %401 = vmatprep.subr.mxu0 0.0
    %402 = vmatpush1.msra.mxu0 0.0
    %403 = vmatprep.subr.mxu0 0.0
    %404 = vmatpush1.msra.mxu0 0.0
    %405 = vmatprep.subr.mxu0 0.0
    %406 = vmatpush1.msra.mxu0 0.0
    %407 = vmatprep.subr.mxu0 0.0
    %408 = vmatpush1.msra.mxu0 0.0
    %409 = vmatprep.subr.mxu0 0.0
    %410 = vmatpush1.msra.mxu0 0.0
    %411 = vmatprep.subr.mxu0 0.0
    %412 = vmatpush1.msra.mxu0 0.0
    %413 = vmatprep.subr.mxu0 0.0
    %414 = vmatpush1.msra.mxu0 0.0
    %415 = vmatprep.subr.mxu0 0.0
    %416 = vmatpush1.msra.mxu0 0.0
    %417 = vmatprep.subr.mxu0 0.0
    %418 = vmatpush1.msra.mxu0 0.0
    %419 = vmatprep.subr.mxu0 0.0
    %420 = vmatpush1.msra.mxu0 0.0
    %421 = vmatprep.subr.mxu0 0.0
    %422 = vmatpush1.msra.mxu0 0.0
    %423 = vmatprep.subr.mxu0 0.0
    %424 = vmatpush1.msra.mxu0 0.0
    %425 = vmatprep.subr.mxu0 0.0
    %426 = vmatpush1.msra.mxu0 0.0
    %427 = vmatprep.subr.mxu0 0.0
    %428 = vmatpush1.msra.mxu0 0.0
    %429 = vmatprep.subr.mxu0 0.0
    %430 = vmatpush1.msra.mxu0 0.0
    %431 = vmatprep.mubr.f32.mxu0 0.0
    %432 = vmatmul.mubr.f32.gmra.mrb[0].mxu0 %v350
    %v433 = vpop.f32.mrb[0].mxu0
    %v434 = vadd.f32 0.0, %v433
    %v435 = vpop.f32.mrb[0].mxu0
    %436 = vdwg.mxu0
    %v437 = vadd.f32 %v341, %v434
    %s438 = sadd.s32 0, 4
    %s439 = scalar_lea.vmem [#allocation5], %s438
    %v440 = vld [vmem:[%s439] sm:$0x1]
    %v441 = vlaneseq
    %v442 = vshrl.u32 %v441, 7
    %v443 = vsub.s32 0, %v442
    %v444 = vrot.slane %v440, %v443
    %v445 = vsub.f32 %v57, %v444
    %v446 = vand.u32 2147483647, %v445
    %v447 = vld [vmem:[#allocation7 + $0x200] sm:$0xff]
    %v448 = vld [vmem:[#allocation7 + $0x208] sm:$0xff]
    %v449 = vld [vmem:[#allocation7 + $0x210] sm:$0xff]
    %v450 = vld [vmem:[#allocation7 + $0x218] sm:$0xff]
    %v451 = vld [vmem:[#allocation7 + $0x220] sm:$0xff]
    %v452 = vld [vmem:[#allocation7 + $0x228] sm:$0xff]
    %v453 = vld [vmem:[#allocation7 + $0x230] sm:$0xff]
    %v454 = vld [vmem:[#allocation7 + $0x238] sm:$0xff]
    %v455 = vld [vmem:[#allocation7 + $0x240] sm:$0xff]
    %v456 = vld [vmem:[#allocation7 + $0x248] sm:$0xff]
    %v457 = vld [vmem:[#allocation7 + $0x250] sm:$0xff]
    %v458 = vld [vmem:[#allocation7 + $0x258] sm:$0xff]
    %v459 = vld [vmem:[#allocation7 + $0x260] sm:$0xff]
    %v460 = vld [vmem:[#allocation7 + $0x268] sm:$0xff]
    %v461 = vld [vmem:[#allocation7 + $0x270] sm:$0xff]
    %v462 = vld [vmem:[#allocation7 + $0x278] sm:$0xff]
    %463 = vmatprep.subr.mxu0 0.0
    %464 = vmatpush1.msra.mxu0 %v447
    %465 = vmatprep.subr.mxu0 0.0
    %466 = vmatpush1.msra.mxu0 %v448
    %467 = vmatprep.subr.mxu0 0.0
    %468 = vmatpush1.msra.mxu0 %v449
    %469 = vmatprep.subr.mxu0 0.0
    %470 = vmatpush1.msra.mxu0 %v450
    %471 = vmatprep.subr.mxu0 0.0
    %472 = vmatpush1.msra.mxu0 %v451
    %473 = vmatprep.subr.mxu0 0.0
    %474 = vmatpush1.msra.mxu0 %v452
    %475 = vmatprep.subr.mxu0 0.0
    %476 = vmatpush1.msra.mxu0 %v453
    %477 = vmatprep.subr.mxu0 0.0
    %478 = vmatpush1.msra.mxu0 %v454
    %479 = vmatprep.subr.mxu0 0.0
    %480 = vmatpush1.msra.mxu0 %v455
    %481 = vmatprep.subr.mxu0 0.0
    %482 = vmatpush1.msra.mxu0 %v456
    %483 = vmatprep.subr.mxu0 0.0
    %484 = vmatpush1.msra.mxu0 %v457
    %485 = vmatprep.subr.mxu0 0.0
    %486 = vmatpush1.msra.mxu0 %v458
    %487 = vmatprep.subr.mxu0 0.0
    %488 = vmatpush1.msra.mxu0 %v459
    %489 = vmatprep.subr.mxu0 0.0
    %490 = vmatpush1.msra.mxu0 %v460
    %491 = vmatprep.subr.mxu0 0.0
    %492 = vmatpush1.msra.mxu0 %v461
    %493 = vmatprep.subr.mxu0 0.0
    %494 = vmatpush1.msra.mxu0 %v462
    %495 = vmatprep.subr.mxu0 0.0
    %496 = vmatpush1.msra.mxu0 0.0
    %497 = vmatprep.subr.mxu0 0.0
    %498 = vmatpush1.msra.mxu0 0.0
    %499 = vmatprep.subr.mxu0 0.0
    %500 = vmatpush1.msra.mxu0 0.0
    %501 = vmatprep.subr.mxu0 0.0
    %502 = vmatpush1.msra.mxu0 0.0
    %503 = vmatprep.subr.mxu0 0.0
    %504 = vmatpush1.msra.mxu0 0.0
    %505 = vmatprep.subr.mxu0 0.0
    %506 = vmatpush1.msra.mxu0 0.0
    %507 = vmatprep.subr.mxu0 0.0
    %508 = vmatpush1.msra.mxu0 0.0
    %509 = vmatprep.subr.mxu0 0.0
    %510 = vmatpush1.msra.mxu0 0.0
    %511 = vmatprep.subr.mxu0 0.0
    %512 = vmatpush1.msra.mxu0 0.0
    %513 = vmatprep.subr.mxu0 0.0
    %514 = vmatpush1.msra.mxu0 0.0
    %515 = vmatprep.subr.mxu0 0.0
    %516 = vmatpush1.msra.mxu0 0.0
    %517 = vmatprep.subr.mxu0 0.0
    %518 = vmatpush1.msra.mxu0 0.0
    %519 = vmatprep.subr.mxu0 0.0
    %520 = vmatpush1.msra.mxu0 0.0
    %521 = vmatprep.subr.mxu0 0.0
    %522 = vmatpush1.msra.mxu0 0.0
    %523 = vmatprep.subr.mxu0 0.0
    %524 = vmatpush1.msra.mxu0 0.0
    %525 = vmatprep.subr.mxu0 0.0
    %526 = vmatpush1.msra.mxu0 0.0
    %527 = vmatprep.mubr.f32.mxu0 0.0
    %528 = vmatmul.mubr.f32.gmra.mrb[0].mxu0 %v446
    %v529 = vpop.f32.mrb[0].mxu0
    %v530 = vadd.f32 0.0, %v529
    %v531 = vpop.f32.mrb[0].mxu0
    %532 = vdwg.mxu0
    %v533 = vadd.f32 %v437, %v530
    %s534 = sadd.s32 0, 5
    %s535 = scalar_lea.vmem [#allocation5], %s534
    %v536 = vld [vmem:[%s535] sm:$0x1]
    %v537 = vlaneseq
    %v538 = vshrl.u32 %v537, 7
    %v539 = vsub.s32 0, %v538
    %v540 = vrot.slane %v536, %v539
    %v541 = vsub.f32 %v57, %v540
    %v542 = vand.u32 2147483647, %v541
    %v543 = vld [vmem:[#allocation7 + $0x280] sm:$0xff]
    %v544 = vld [vmem:[#allocation7 + $0x288] sm:$0xff]
    %v545 = vld [vmem:[#allocation7 + $0x290] sm:$0xff]
    %v546 = vld [vmem:[#allocation7 + $0x298] sm:$0xff]
    %v547 = vld [vmem:[#allocation7 + $0x2a0] sm:$0xff]
    %v548 = vld [vmem:[#allocation7 + $0x2a8] sm:$0xff]
    %v549 = vld [vmem:[#allocation7 + $0x2b0] sm:$0xff]
    %v550 = vld [vmem:[#allocation7 + $0x2b8] sm:$0xff]
    %v551 = vld [vmem:[#allocation7 + $0x2c0] sm:$0xff]
    %v552 = vld [vmem:[#allocation7 + $0x2c8] sm:$0xff]
    %v553 = vld [vmem:[#allocation7 + $0x2d0] sm:$0xff]
    %v554 = vld [vmem:[#allocation7 + $0x2d8] sm:$0xff]
    %v555 = vld [vmem:[#allocation7 + $0x2e0] sm:$0xff]
    %v556 = vld [vmem:[#allocation7 + $0x2e8] sm:$0xff]
    %v557 = vld [vmem:[#allocation7 + $0x2f0] sm:$0xff]
    %v558 = vld [vmem:[#allocation7 + $0x2f8] sm:$0xff]
    %559 = vmatprep.subr.mxu0 0.0
    %560 = vmatpush1.msra.mxu0 %v543
    %561 = vmatprep.subr.mxu0 0.0
    %562 = vmatpush1.msra.mxu0 %v544
    %563 = vmatprep.subr.mxu0 0.0
    %564 = vmatpush1.msra.mxu0 %v545
    %565 = vmatprep.subr.mxu0 0.0
    %566 = vmatpush1.msra.mxu0 %v546
    %567 = vmatprep.subr.mxu0 0.0
    %568 = vmatpush1.msra.mxu0 %v547
    %569 = vmatprep.subr.mxu0 0.0
    %570 = vmatpush1.msra.mxu0 %v548
    %571 = vmatprep.subr.mxu0 0.0
    %572 = vmatpush1.msra.mxu0 %v549
    %573 = vmatprep.subr.mxu0 0.0
    %574 = vmatpush1.msra.mxu0 %v550
    %575 = vmatprep.subr.mxu0 0.0
    %576 = vmatpush1.msra.mxu0 %v551
    %577 = vmatprep.subr.mxu0 0.0
    %578 = vmatpush1.msra.mxu0 %v552
    %579 = vmatprep.subr.mxu0 0.0
    %580 = vmatpush1.msra.mxu0 %v553
    %581 = vmatprep.subr.mxu0 0.0
    %582 = vmatpush1.msra.mxu0 %v554
    %583 = vmatprep.subr.mxu0 0.0
    %584 = vmatpush1.msra.mxu0 %v555
    %585 = vmatprep.subr.mxu0 0.0
    %586 = vmatpush1.msra.mxu0 %v556
    %587 = vmatprep.subr.mxu0 0.0
    %588 = vmatpush1.msra.mxu0 %v557
    %589 = vmatprep.subr.mxu0 0.0
    %590 = vmatpush1.msra.mxu0 %v558
    %591 = vmatprep.subr.mxu0 0.0
    %592 = vmatpush1.msra.mxu0 0.0
    %593 = vmatprep.subr.mxu0 0.0
    %594 = vmatpush1.msra.mxu0 0.0
    %595 = vmatprep.subr.mxu0 0.0
    %596 = vmatpush1.msra.mxu0 0.0
    %597 = vmatprep.subr.mxu0 0.0
    %598 = vmatpush1.msra.mxu0 0.0
    %599 = vmatprep.subr.mxu0 0.0
    %600 = vmatpush1.msra.mxu0 0.0
    %601 = vmatprep.subr.mxu0 0.0
    %602 = vmatpush1.msra.mxu0 0.0
    %603 = vmatprep.subr.mxu0 0.0
    %604 = vmatpush1.msra.mxu0 0.0
    %605 = vmatprep.subr.mxu0 0.0
    %606 = vmatpush1.msra.mxu0 0.0
    %607 = vmatprep.subr.mxu0 0.0
    %608 = vmatpush1.msra.mxu0 0.0
    %609 = vmatprep.subr.mxu0 0.0
    %610 = vmatpush1.msra.mxu0 0.0
    %611 = vmatprep.subr.mxu0 0.0
    %612 = vmatpush1.msra.mxu0 0.0
    %613 = vmatprep.subr.mxu0 0.0
    %614 = vmatpush1.msra.mxu0 0.0
    %615 = vmatprep.subr.mxu0 0.0
    %616 = vmatpush1.msra.mxu0 0.0
    %617 = vmatprep.subr.mxu0 0.0
    %618 = vmatpush1.msra.mxu0 0.0
    %619 = vmatprep.subr.mxu0 0.0
    %620 = vmatpush1.msra.mxu0 0.0
    %621 = vmatprep.subr.mxu0 0.0
    %622 = vmatpush1.msra.mxu0 0.0
    %623 = vmatprep.mubr.f32.mxu0 0.0
    %624 = vmatmul.mubr.f32.gmra.mrb[0].mxu0 %v542
    %v625 = vpop.f32.mrb[0].mxu0
    %v626 = vadd.f32 0.0, %v625
    %v627 = vpop.f32.mrb[0].mxu0
    %628 = vdwg.mxu0
    %v629 = vadd.f32 %v533, %v626
    %s630 = sadd.s32 0, 6
    %s631 = scalar_lea.vmem [#allocation5], %s630
    %v632 = vld [vmem:[%s631] sm:$0x1]
    %v633 = vlaneseq
    %v634 = vshrl.u32 %v633, 7
    %v635 = vsub.s32 0, %v634
    %v636 = vrot.slane %v632, %v635
    %v637 = vsub.f32 %v57, %v636
    %v638 = vand.u32 2147483647, %v637
    %v639 = vld [vmem:[#allocation7 + $0x300] sm:$0xff]
    %v640 = vld [vmem:[#allocation7 + $0x308] sm:$0xff]
    %v641 = vld [vmem:[#allocation7 + $0x310] sm:$0xff]
    %v642 = vld [vmem:[#allocation7 + $0x318] sm:$0xff]
    %v643 = vld [vmem:[#allocation7 + $0x320] sm:$0xff]
    %v644 = vld [vmem:[#allocation7 + $0x328] sm:$0xff]
    %v645 = vld [vmem:[#allocation7 + $0x330] sm:$0xff]
    %v646 = vld [vmem:[#allocation7 + $0x338] sm:$0xff]
    %v647 = vld [vmem:[#allocation7 + $0x340] sm:$0xff]
    %v648 = vld [vmem:[#allocation7 + $0x348] sm:$0xff]
    %v649 = vld [vmem:[#allocation7 + $0x350] sm:$0xff]
    %v650 = vld [vmem:[#allocation7 + $0x358] sm:$0xff]
    %v651 = vld [vmem:[#allocation7 + $0x360] sm:$0xff]
    %v652 = vld [vmem:[#allocation7 + $0x368] sm:$0xff]
    %v653 = vld [vmem:[#allocation7 + $0x370] sm:$0xff]
    %v654 = vld [vmem:[#allocation7 + $0x378] sm:$0xff]
    %655 = vmatprep.subr.mxu0 0.0
    %656 = vmatpush1.msra.mxu0 %v639
    %657 = vmatprep.subr.mxu0 0.0
    %658 = vmatpush1.msra.mxu0 %v640
    %659 = vmatprep.subr.mxu0 0.0
    %660 = vmatpush1.msra.mxu0 %v641
    %661 = vmatprep.subr.mxu0 0.0
    %662 = vmatpush1.msra.mxu0 %v642
    %663 = vmatprep.subr.mxu0 0.0
    %664 = vmatpush1.msra.mxu0 %v643
    %665 = vmatprep.subr.mxu0 0.0
    %666 = vmatpush1.msra.mxu0 %v644
    %667 = vmatprep.subr.mxu0 0.0
    %668 = vmatpush1.msra.mxu0 %v645
    %669 = vmatprep.subr.mxu0 0.0
    %670 = vmatpush1.msra.mxu0 %v646
    %671 = vmatprep.subr.mxu0 0.0
    %672 = vmatpush1.msra.mxu0 %v647
    %673 = vmatprep.subr.mxu0 0.0
    %674 = vmatpush1.msra.mxu0 %v648
    %675 = vmatprep.subr.mxu0 0.0
    %676 = vmatpush1.msra.mxu0 %v649
    %677 = vmatprep.subr.mxu0 0.0
    %678 = vmatpush1.msra.mxu0 %v650
    %679 = vmatprep.subr.mxu0 0.0
    %680 = vmatpush1.msra.mxu0 %v651
    %681 = vmatprep.subr.mxu0 0.0
    %682 = vmatpush1.msra.mxu0 %v652
    %683 = vmatprep.subr.mxu0 0.0
    %684 = vmatpush1.msra.mxu0 %v653
    %685 = vmatprep.subr.mxu0 0.0
    %686 = vmatpush1.msra.mxu0 %v654
    %687 = vmatprep.subr.mxu0 0.0
    %688 = vmatpush1.msra.mxu0 0.0
    %689 = vmatprep.subr.mxu0 0.0
    %690 = vmatpush1.msra.mxu0 0.0
    %691 = vmatprep.subr.mxu0 0.0
    %692 = vmatpush1.msra.mxu0 0.0
    %693 = vmatprep.subr.mxu0 0.0
    %694 = vmatpush1.msra.mxu0 0.0
    %695 = vmatprep.subr.mxu0 0.0
    %696 = vmatpush1.msra.mxu0 0.0
    %697 = vmatprep.subr.mxu0 0.0
    %698 = vmatpush1.msra.mxu0 0.0
    %699 = vmatprep.subr.mxu0 0.0
    %700 = vmatpush1.msra.mxu0 0.0
    %701 = vmatprep.subr.mxu0 0.0
    %702 = vmatpush1.msra.mxu0 0.0
    %703 = vmatprep.subr.mxu0 0.0
    %704 = vmatpush1.msra.mxu0 0.0
    %705 = vmatprep.subr.mxu0 0.0
    %706 = vmatpush1.msra.mxu0 0.0
    %707 = vmatprep.subr.mxu0 0.0
    %708 = vmatpush1.msra.mxu0 0.0
    %709 = vmatprep.subr.mxu0 0.0
    %710 = vmatpush1.msra.mxu0 0.0
    %711 = vmatprep.subr.mxu0 0.0
    %712 = vmatpush1.msra.mxu0 0.0
    %713 = vmatprep.subr.mxu0 0.0
    %714 = vmatpush1.msra.mxu0 0.0
    %715 = vmatprep.subr.mxu0 0.0
    %716 = vmatpush1.msra.mxu0 0.0
    %717 = vmatprep.subr.mxu0 0.0
    %718 = vmatpush1.msra.mxu0 0.0
    %719 = vmatprep.mubr.f32.mxu0 0.0
    %720 = vmatmul.mubr.f32.gmra.mrb[0].mxu0 %v638
    %v721 = vpop.f32.mrb[0].mxu0
    %v722 = vadd.f32 0.0, %v721
    %v723 = vpop.f32.mrb[0].mxu0
    %724 = vdwg.mxu0
    %v725 = vadd.f32 %v629, %v722
    %s726 = sadd.s32 0, 7
    %s727 = scalar_lea.vmem [#allocation5], %s726
    %v728 = vld [vmem:[%s727] sm:$0x1]
    %v729 = vlaneseq
    %v730 = vshrl.u32 %v729, 7
    %v731 = vsub.s32 0, %v730
    %v732 = vrot.slane %v728, %v731
    %v733 = vsub.f32 %v57, %v732
    %v734 = vand.u32 2147483647, %v733
    %v735 = vld [vmem:[#allocation7 + $0x380] sm:$0xff]
    %v736 = vld [vmem:[#allocation7 + $0x388] sm:$0xff]
    %v737 = vld [vmem:[#allocation7 + $0x390] sm:$0xff]
    %v738 = vld [vmem:[#allocation7 + $0x398] sm:$0xff]
    %v739 = vld [vmem:[#allocation7 + $0x3a0] sm:$0xff]
    %v740 = vld [vmem:[#allocation7 + $0x3a8] sm:$0xff]
    %v741 = vld [vmem:[#allocation7 + $0x3b0] sm:$0xff]
    %v742 = vld [vmem:[#allocation7 + $0x3b8] sm:$0xff]
    %v743 = vld [vmem:[#allocation7 + $0x3c0] sm:$0xff]
    %v744 = vld [vmem:[#allocation7 + $0x3c8] sm:$0xff]
    %v745 = vld [vmem:[#allocation7 + $0x3d0] sm:$0xff]
    %v746 = vld [vmem:[#allocation7 + $0x3d8] sm:$0xff]
    %v747 = vld [vmem:[#allocation7 + $0x3e0] sm:$0xff]
    %v748 = vld [vmem:[#allocation7 + $0x3e8] sm:$0xff]
    %v749 = vld [vmem:[#allocation7 + $0x3f0] sm:$0xff]
    %v750 = vld [vmem:[#allocation7 + $0x3f8] sm:$0xff]
    %751 = vmatprep.subr.mxu0 0.0
    %752 = vmatpush1.msra.mxu0 %v735
    %753 = vmatprep.subr.mxu0 0.0
    %754 = vmatpush1.msra.mxu0 %v736
    %755 = vmatprep.subr.mxu0 0.0
    %756 = vmatpush1.msra.mxu0 %v737
    %757 = vmatprep.subr.mxu0 0.0
    %758 = vmatpush1.msra.mxu0 %v738
    %759 = vmatprep.subr.mxu0 0.0
    %760 = vmatpush1.msra.mxu0 %v739
    %761 = vmatprep.subr.mxu0 0.0
    %762 = vmatpush1.msra.mxu0 %v740
    %763 = vmatprep.subr.mxu0 0.0
    %764 = vmatpush1.msra.mxu0 %v741
    %765 = vmatprep.subr.mxu0 0.0
    %766 = vmatpush1.msra.mxu0 %v742
    %767 = vmatprep.subr.mxu0 0.0
    %768 = vmatpush1.msra.mxu0 %v743
    %769 = vmatprep.subr.mxu0 0.0
    %770 = vmatpush1.msra.mxu0 %v744
    %771 = vmatprep.subr.mxu0 0.0
    %772 = vmatpush1.msra.mxu0 %v745
    %773 = vmatprep.subr.mxu0 0.0
    %774 = vmatpush1.msra.mxu0 %v746
    %775 = vmatprep.subr.mxu0 0.0
    %776 = vmatpush1.msra.mxu0 %v747
    %777 = vmatprep.subr.mxu0 0.0
    %778 = vmatpush1.msra.mxu0 %v748
    %779 = vmatprep.subr.mxu0 0.0
    %780 = vmatpush1.msra.mxu0 %v749
    %781 = vmatprep.subr.mxu0 0.0
    %782 = vmatpush1.msra.mxu0 %v750
    %783 = vmatprep.subr.mxu0 0.0
    %784 = vmatpush1.msra.mxu0 0.0
    %785 = vmatprep.subr.mxu0 0.0
    %786 = vmatpush1.msra.mxu0 0.0
    %787 = vmatprep.subr.mxu0 0.0
    %788 = vmatpush1.msra.mxu0 0.0
    %789 = vmatprep.subr.mxu0 0.0
    %790 = vmatpush1.msra.mxu0 0.0
    %791 = vmatprep.subr.mxu0 0.0
    %792 = vmatpush1.msra.mxu0 0.0
    %793 = vmatprep.subr.mxu0 0.0
    %794 = vmatpush1.msra.mxu0 0.0
    %795 = vmatprep.subr.mxu0 0.0
    %796 = vmatpush1.msra.mxu0 0.0
    %797 = vmatprep.subr.mxu0 0.0
    %798 = vmatpush1.msra.mxu0 0.0
    %799 = vmatprep.subr.mxu0 0.0
    %800 = vmatpush1.msra.mxu0 0.0
    %801 = vmatprep.subr.mxu0 0.0
    %802 = vmatpush1.msra.mxu0 0.0
    %803 = vmatprep.subr.mxu0 0.0
    %804 = vmatpush1.msra.mxu0 0.0
    %805 = vmatprep.subr.mxu0 0.0
    %806 = vmatpush1.msra.mxu0 0.0
    %807 = vmatprep.subr.mxu0 0.0
    %808 = vmatpush1.msra.mxu0 0.0
    %809 = vmatprep.subr.mxu0 0.0
    %810 = vmatpush1.msra.mxu0 0.0
    %811 = vmatprep.subr.mxu0 0.0
    %812 = vmatpush1.msra.mxu0 0.0
    %813 = vmatprep.subr.mxu0 0.0
    %814 = vmatpush1.msra.mxu0 0.0
    %815 = vmatprep.mubr.f32.mxu0 0.0
    %816 = vmatmul.mubr.f32.gmra.mrb[0].mxu0 %v734
    %v817 = vpop.f32.mrb[0].mxu0
    %v818 = vadd.f32 0.0, %v817
    %v819 = vpop.f32.mrb[0].mxu0
    %820 = vdwg.mxu0
    %v821 = vadd.f32 %v725, %v818
    %v822 = vld [vmem:[#allocation8] sm:$0xff]
    %v823 = vsub.f32 0.0, %v821
    %v824 = vmul.f32 %v823, 1.442695
    %v825 = vpow.pop %v824
    %v826 = vadd.f32 %v822, %v825
    %827 = vst [vmem:[#allocation8] sm:$0xff] %v826
    // Predicated region
    $region30: #{tpu_custom_call.1} parent=1 // pred_check
      _
    $region31: #{tpu_custom_call.1} parent=1 // pred_check_branch
      %829 = sbr.rel (0) target = $region33
    $region32: #{tpu_custom_call.1} parent=1 // pred_region
      %s831 = ssub.s32 128, 128
      %832 = vsyncadd [#allocation4], %s831
      %s834 = sshll.u32 [#allocation8], 4
      %s835 = int_to_ptr.vmem [resolvable:$true] %s834
      %837 = dma.vmem_to_hbm [thread:$0]  %s835, 128, %s3, [#allocation4]
    $region33: #{tpu_custom_call.1} parent=1 // pred_fallthru
      _
    // Predicated region
    $region34: #{tpu_custom_call.1} parent=1 // pred_check
      _
    $region35: #{tpu_custom_call.1} parent=1 // pred_check_branch
      %839 = sbr.rel (0) target = $region37
    $region36: #{tpu_custom_call.1} parent=1 // pred_region
      %840 = dma.done [#allocation4], 128
    $region37: #{tpu_custom_call.1} parent=1 // pred_fallthru
      _
    %841 = vsyncpa [#allocation3], 1
    %842 = vsyncpa [#allocation6], 1
    %843 = vsyncpa [#allocation4], 1

</llo_original>
